<compile_context>
chip_gen: v5e
topology: v5e:2x2
jax: 0.10.0
libtpu: 0.0.40
codegen_flags: <defaults>
</compile_context>

<pallas_src>
import functools

import numpy as np
import jax
import jax.numpy as jnp
from jax import lax
from jax.experimental import pallas as pl
from jax.experimental.pallas import tpu as pltpu

PADDING_MODES = ("reflect", "replicate", "constant")


def _border_slabs(x, axis, p, mode):
    """Low/high border slabs of width `p` along `axis` (p/axis/mode static).

    reflect  : edge not repeated (torch 'reflect' / numpy 'reflect')
    replicate: edge broadcast    (torch 'replicate' / numpy 'edge')
    constant : zeros
    """
    size = x.shape[axis]
    slab_shape = list(x.shape)
    slab_shape[axis] = p
    slab_shape = tuple(slab_shape)

    if mode == "constant":
        z = jnp.zeros(slab_shape, x.dtype)
        return z, z

    def row(i):
        return lax.slice_in_dim(x, i, i + 1, axis=axis)

    if mode == "replicate":
        return (jnp.broadcast_to(row(0), slab_shape),
                jnp.broadcast_to(row(size - 1), slab_shape))

    # reflect: low = x[p], ..., x[1]; high = x[size-2], ..., x[size-1-p]
    if p == 1:
        return row(1), row(size - 2)
    low = jnp.concatenate([row(i) for i in range(p, 0, -1)], axis=axis)
    high = jnp.concatenate(
        [row(i) for i in range(size - 2, size - 2 - p, -1)], axis=axis)
    return low, high


def _pad_hw_kernel(d_map_ref, x_ref, o_ref, *, pad, mode, d_in_size):
    """One output-depth slice: pad H and W, single full-block store to o_ref.

    x_ref: (B, H, W) block (B = batch*channel tile), o_ref: (B, Ho, Wo).
    Depth padding was already resolved by the input index_map (d_map).
    """
    del d_map_ref  # consumed only by the index_maps
    p = pad

    def emit():
        x = x_ref[...]                              # (B, H, W)
        if p == 0:
            o_ref[...] = x
            return

        # --- W (lane) padding: one (B, H, Wo) intermediate ---
        lw, rw = _border_slabs(x, 2, p, mode)
        xw = jnp.concatenate([lw, x, rw], axis=2)

        # --- H (sublane) padding + single aligned full-block store ---
        lh, hh = _border_slabs(xw, 1, p, mode)
        o_ref[...] = jnp.concatenate([lh, xw, hh], axis=1)   # (B, Ho, Wo)

    if mode == "constant" and p > 0:
        d_out = pl.program_id(1)
        in_range = jnp.logical_and(d_out >= p, d_out < p + d_in_size)

        @pl.when(jnp.logical_not(in_range))
        def _():
            o_ref[...] = jnp.zeros_like(o_ref)      # pure zero depth slice

        @pl.when(in_range)
        def _():
            emit()
    else:
        emit()


def _depth_index_map(D, Do, pad, mode):
    """Static int32 table: output-depth index -> input-depth index."""
    d = np.arange(Do) - pad
    if mode == "reflect":
        d_in = np.where(d < 0, -d, np.where(d >= D, 2 * (D - 1) - d, d))
    else:  # replicate / constant (constant border slices are overwritten w/ 0)
        d_in = np.clip(d, 0, D - 1)
    return jnp.asarray(d_in, dtype=jnp.int32)


def _round_up(x, m):
    return ((x + m - 1) // m) * m


def _vmem_capacity_bytes():
    """Physical VMEM per TensorCore; conservative fallback if query fails."""
    try:
        info = pltpu.get_tpu_info()
        cap = getattr(info, "vmem_capacity_bytes", None)
        if cap:
            return int(cap)
    except Exception:
        pass
    return 64 * 1024 * 1024  # v7x per-core size: safe lower bound everywhere


def pad3d(x, pad, mode):
    assert mode in PADDING_MODES
    assert pad >= 0
    N, C, D, H, W = x.shape
    if mode == "reflect":
        # PyTorch raises if pad >= dim for reflect; avoid silent wrong slices.
        assert pad < D and pad < H and pad < W, (
            "reflect padding requires pad < each spatial dimension")

    Do, Ho, Wo = D + 2 * pad, H + 2 * pad, W + 2 * pad
    NC = N * C
    xr = x.reshape(NC, D, H, W)                     # contiguous -> free reshape

    d_map = _depth_index_map(D, Do, pad, mode)

    # ------------------------------------------------------------------
    # VMEM budgeting with the *tiled* footprint (lane/sublane padded).
    # ------------------------------------------------------------------
    itemsize = x.dtype.itemsize
    sub = max(8, 32 // itemsize)          # 8 f32, 16 bf16, 32 int8
    lane = 128
    in_tile = _round_up(H, sub) * _round_up(W, lane) * itemsize
    out_tile = _round_up(Ho, sub) * _round_up(Wo, lane) * itemsize
    xw_tile = _round_up(H, sub) * _round_up(Wo, lane) * itemsize
    # double-buffered in/out blocks + single-buffered concat intermediates
    # (the (B,H,Wo) W-padded slab and the full (B,Ho,Wo) result pre-store).
    bytes_per_nc = 2 * (in_tile + out_tile) + xw_tile + out_tile

    vmem_cap = _vmem_capacity_bytes()
    budget = max(4 * 1024 * 1024, vmem_cap // 2)      # ~64 MiB v5e/v6e, ~32 MiB v7x
    vmem_limit = int(min(vmem_cap, budget + budget // 2))

    nc_blk = int(max(1, min(NC, budget // bytes_per_nc)))
    if NC >= 2:
        # Keep grid axis 0 at extent >= 2 so v7x's two TensorCores both get work.
        nc_blk = min(nc_blk, (NC + 1) // 2)
    grid = (pl.cdiv(NC, nc_blk), Do)

    kernel = functools.partial(_pad_hw_kernel, pad=pad, mode=mode, d_in_size=D)

    out = pl.pallas_call(
        kernel,
        out_shape=jax.ShapeDtypeStruct((NC, Do, Ho, Wo), x.dtype),
        grid_spec=pltpu.PrefetchScalarGridSpec(
            num_scalar_prefetch=1,
            # Do innermost: consecutive border depths hit the same input block
            # (replicate/constant), so the pipeline skips the redundant DMA.
            grid=grid,
            in_specs=[
                pl.BlockSpec((nc_blk, None, H, W),
                             lambda g, d, dmap: (g, dmap[d], 0, 0)),
            ],
            out_specs=pl.BlockSpec((nc_blk, None, Ho, Wo),
                                   lambda g, d, dmap: (g, d, 0, 0)),
        ),
        compiler_params=pltpu.CompilerParams(
            dimension_semantics=("parallel", "parallel"),
            vmem_limit_bytes=vmem_limit),
    )(d_map, xr)
    return out.reshape(N, C, Do, Ho, Wo)


class Pad3d:
    """JAX/Pallas mirror of the PyTorch Pad3d module (no parameters)."""

    def __init__(self, pad, mode):
        assert mode in PADDING_MODES
        self.pad = pad
        self.mode = mode

    def __call__(self, x):
        return pad3d(x, self.pad, self.mode)


if __name__ == "__main__":
    key = jax.random.PRNGKey(0)
    x = jax.random.normal(key, (2, 4, 8, 12, 16), dtype=jnp.float32)
    pad = 2

    numpy_mode = {"reflect": "reflect", "replicate": "edge", "constant": "constant"}
    pad_cfg = ((0, 0), (0, 0), (pad, pad), (pad, pad), (pad, pad))

    for mode in PADDING_MODES:
        module = Pad3d(pad, mode)
        out = jax.block_until_ready(module(x))
        ref = jnp.pad(x, pad_cfg, mode=numpy_mode[mode])
        assert out.shape == ref.shape, (out.shape, ref.shape)
        assert jnp.allclose(out, ref), f"mismatch for mode={mode}"

    print("KERNEL_OK")
</pallas_src>

<mosaic_0001>
module attributes {stable_mosaic.version = 11 : i64} {
  func.func @_pad_hw_kernel(%arg0: i32, %arg1: i32, %arg2: memref<12xi32, #tpu.memory_space<smem>>, %arg3: memref<4x1x12x16xf32, #tpu.memory_space<vmem>>, %arg4: memref<4x1x16x20xf32, #tpu.memory_space<vmem>>) attributes {dimension_semantics = [#tpu.dimension_semantics<parallel>, #tpu.dimension_semantics<parallel>], iteration_bounds = array<i64: 2, 12>, scalar_prefetch = 1 : i64, scratch_operands = 0 : i64, tpu.core_type = #tpu.core_type<tc>, window_params = [{transform_indices = @transform_0, window_bounds = array<i64: 4, 1, 12, 16>}, {transform_indices = @transform_1, window_bounds = array<i64: 4, 1, 16, 20>}]} {
    %c0 = arith.constant 0 : index
    %c0_0 = arith.constant 0 : index
    %c0_1 = arith.constant 0 : index
    %c0_2 = arith.constant 0 : index
    %0 = vector.load %arg3[%c0, %c0_0, %c0_1, %c0_2] : memref<4x1x12x16xf32, #tpu.memory_space<vmem>>, vector<4x1x12x16xf32>
    %1 = vector.shape_cast %0 : vector<4x1x12x16xf32> to vector<4x12x16xf32>
    %2 = vector.extract_strided_slice %1 {offsets = [0, 0, 2], sizes = [4, 12, 1], strides = [1, 1, 1]} : vector<4x12x16xf32> to vector<4x12x1xf32>
    %3 = vector.extract_strided_slice %1 {offsets = [0, 0, 1], sizes = [4, 12, 1], strides = [1, 1, 1]} : vector<4x12x16xf32> to vector<4x12x1xf32>
    %4 = tpu.concatenate %2, %3 in 2 : vector<4x12x1xf32>, vector<4x12x1xf32> -> vector<4x12x2xf32>
    %5 = vector.extract_strided_slice %1 {offsets = [0, 0, 14], sizes = [4, 12, 1], strides = [1, 1, 1]} : vector<4x12x16xf32> to vector<4x12x1xf32>
    %6 = vector.extract_strided_slice %1 {offsets = [0, 0, 13], sizes = [4, 12, 1], strides = [1, 1, 1]} : vector<4x12x16xf32> to vector<4x12x1xf32>
    %7 = tpu.concatenate %5, %6 in 2 : vector<4x12x1xf32>, vector<4x12x1xf32> -> vector<4x12x2xf32>
    %8 = tpu.concatenate %4, %1, %7 in 2 : vector<4x12x2xf32>, vector<4x12x16xf32>, vector<4x12x2xf32> -> vector<4x12x20xf32>
    %9 = vector.extract_strided_slice %8 {offsets = [0, 2, 0], sizes = [4, 1, 20], strides = [1, 1, 1]} : vector<4x12x20xf32> to vector<4x1x20xf32>
    %10 = vector.extract_strided_slice %8 {offsets = [0, 1, 0], sizes = [4, 1, 20], strides = [1, 1, 1]} : vector<4x12x20xf32> to vector<4x1x20xf32>
    %11 = tpu.concatenate %9, %10 in 1 : vector<4x1x20xf32>, vector<4x1x20xf32> -> vector<4x2x20xf32>
    %12 = vector.extract_strided_slice %8 {offsets = [0, 10, 0], sizes = [4, 1, 20], strides = [1, 1, 1]} : vector<4x12x20xf32> to vector<4x1x20xf32>
    %13 = vector.extract_strided_slice %8 {offsets = [0, 9, 0], sizes = [4, 1, 20], strides = [1, 1, 1]} : vector<4x12x20xf32> to vector<4x1x20xf32>
    %14 = tpu.concatenate %12, %13 in 1 : vector<4x1x20xf32>, vector<4x1x20xf32> -> vector<4x2x20xf32>
    %15 = tpu.concatenate %11, %8, %14 in 1 : vector<4x2x20xf32>, vector<4x12x20xf32>, vector<4x2x20xf32> -> vector<4x16x20xf32>
    %c0_3 = arith.constant 0 : index
    %c0_4 = arith.constant 0 : index
    %c0_5 = arith.constant 0 : index
    %c0_6 = arith.constant 0 : index
    %16 = vector.load %arg4[%c0_3, %c0_4, %c0_5, %c0_6] : memref<4x1x16x20xf32, #tpu.memory_space<vmem>>, vector<4x1x16x20xf32>
    %17 = vector.shape_cast %16 : vector<4x1x16x20xf32> to vector<4x16x20xf32>
    %18 = vector.shape_cast %15 : vector<4x16x20xf32> to vector<4x1x16x20xf32>
    tpu.vector_store %arg4[%c0_3, %c0_4, %c0_5, %c0_6], %18 {strides = array<i32>} : memref<4x1x16x20xf32, #tpu.memory_space<vmem>>, vector<4x1x16x20xf32>,
    return
  }
  func.func @transform_0(%arg0: i32, %arg1: i32, %arg2: memref<12xi32, #tpu.memory_space<smem>>) -> (i32, i32, i32, i32) {
    %0 = arith.index_cast %arg1 : i32 to index
    %1 = memref.load %arg2[%0] : memref<12xi32, #tpu.memory_space<smem>>
    %c0_i32 = arith.constant 0 : i32
    %c0_i32_0 = arith.constant 0 : i32
    %c0_i32_1 = arith.constant 0 : i32
    return %arg0, %1, %c0_i32, %c0_i32_0 : i32, i32, i32, i32
  }
  func.func @transform_1(%arg0: i32, %arg1: i32, %arg2: memref<12xi32, #tpu.memory_space<smem>>) -> (i32, i32, i32, i32) {
    %c0_i32 = arith.constant 0 : i32
    %c0_i32_0 = arith.constant 0 : i32
    %c0_i32_1 = arith.constant 0 : i32
    return %arg0, %arg1, %c0_i32, %c0_i32_0 : i32, i32, i32, i32
  }
}

</mosaic_0001>

<llo_original>
// kernel: tpu_custom_call.1
$region0: #{tpu_custom_call.1}
  #allocation0 [shape = 'u32[]', space=smem, size = 0x4, offset = 0x4, fixed_abs, tag = 'smem constant byte address 0x4 - core index']
  #allocation1 [shape = 'u32[72,128]{1,0:T(1,128)}', space=vmem, size = 0x9000, scoped, tag = 'internal scratch']
  #allocation2 [shape = 's32[1]{0}', space=sflag, size = 0x4, scoped, tag = 'scoped memory for tpu_custom_call.1']
  #allocation3 [shape = 'u8[512]{0}', space=smem, size = 0x200, scoped, tag = 'prefetched SMEM operand 0']
  #allocation7 [shape = 's32[]', space=sflag, size = 0x4, offset = 0, fixed_abs, tag = 'sflag constant byte address 0x0 - dummy sync flag']
  %s0 = inlined_call_operand.vmem [shape: s32[12], index: 0, kind: input, shape index: {}]
  %s1 = inlined_call_operand.vmem [shape: f32[8,8,12,16], index: 1, kind: input, shape index: {}]
  %s2 = inlined_call_operand.hbm [shape: f32[8,12,16,20], index: 2, kind: output, shape index: {}]
  %s3 = sld [smem:[#allocation0]]
  $region75: #{tpu_custom_call.1} parent=0
    _
  %s5 = ssub.s32 1, %s3
  %s6 = scalar_select 0, %s5, %s3
  %s8 = sshll.u32 %s0, 4
  %s9 = int_to_ptr.vmem [resolvable:$true] %s8
  %11 = dma.vmem_to_smem %s9, 16, [#allocation3], [#allocation2]
  %13 = dma.done [#allocation2], 16
  %14 = sfence
  $region1: #{tpu_custom_call.1} parent=0
    #allocation4 [shape = 'u8[65536]{0}', space=vmem, size = 0x10000, scoped, tag = 'input window, operand 1']
    #allocation5 [shape = 'u8[65536]{0}', space=vmem, size = 0x10000, scoped, tag = 'output window, operand 0']
    #allocation6 [shape = 's32[2]{0}', space=sflag, size = 0x8, scoped, tag = 'scoped memory for tpu_custom_call.1']
    %15 = vsyncpa [#allocation6], 0
    %s16 = scalar_lea.sflag [#allocation6], 1
    %17 = vsyncpa %s16, 0
    loop: start=0, step=1, limit=26
    $region2: #{tpu_custom_call.1} parent=1 // loop_pre_header
      _
    $region3: #{tpu_custom_call.1} parent=1 // loop_header
      %s19 = sphi 0, %s23
      %p20 = scmp.ge.s32.totalorder %s19, 26
      %s26 = sphi 0, %s38
      %s27 = sphi 0, %s34
      %s28 = sphi 0, %s26
      %s29 = sphi 0, %s27
      %s30 = sphi 0, %s28
      %s31 = sphi 0, %s29
      %s45 = sphi 0, %s47
      %s48 = sphi 0, %s45
      %s49 = sphi 0, %s48
      %s65 = sphi 0, %s49
      %s73 = sphi 0, %s75
      %s76 = sphi 0, %s73
      %s77 = sphi 0, %s76
      %s93 = sphi 0, %s77
    $region4: #{tpu_custom_call.1} parent=1 // loop_header_branch
      %22 = sbr.rel (%p20) target = $region8
    $region5: #{tpu_custom_call.1} parent=1 // loop_body
      %s24 = ssub.s32 %s19, 1
      %s25 = ssub.s32 %s19, 2
      %s32 = sadd.s32 1, %s27
      %p33 = scmp.ge.s32.totalorder %s32, 12
      %s34 = scalar_select %p33, 0, %s32
      %s35 = sadd.s32 1, %s26
      %s36 = scalar_select %p33, %s35, %s26
      %p37 = scmp.ge.s32.totalorder %s36, 2
      %s38 = scalar_select %p37, 0, %s36
      %s39 = sld [smem:[#allocation3 + %s27]]
      %s40 = sld [smem:[#allocation3 + %s34]]
      %s41 = ssub.s32 %s26, %s38
      %s42 = ssub.s32 %s39, %s40
      %s43 = sor.u32 %s41, %s42
      %p44 = scmp.eq.s32.totalorder %s43, 0
      %s46 = sadd.s32 %s45, 1
      %s47 = scalar_select %p44, %s45, %s46
      %p50 = pneg %p44
      %p51 = scmp.eq.s32.totalorder %s19, 23
      %p52 = por %p50, %p51
      %p53 = scmp.ne.s32.totalorder %s45, %s48
      %p54 = scmp.eq.s32.totalorder %s19, 0
      %p55 = por %p53, %p54
      %p56 = scmp.ne.s32.totalorder %s45, %s48
      %p57 = scmp.eq.s32.totalorder %s24, 23
      %p58 = por %p56, %p57
      %p59 = scmp.ne.s32.totalorder %s48, %s49
      %p60 = scmp.eq.s32.totalorder %s24, 0
      %p61 = por %p59, %p60
      %p62 = scmp.ne.s32.totalorder %s48, %s49
      %p63 = scmp.eq.s32.totalorder %s25, 23
      %p64 = por %p62, %p63
      %p66 = scmp.ne.s32.totalorder %s49, %s65
      %p67 = scmp.eq.s32.totalorder %s25, 0
      %p68 = por %p66, %p67
      %s69 = ssub.s32 %s26, %s38
      %s70 = ssub.s32 %s27, %s34
      %s71 = sor.u32 %s69, %s70
      %p72 = scmp.eq.s32.totalorder %s71, 0
      %s74 = sadd.s32 %s73, 1
      %s75 = scalar_select %p72, %s73, %s74
      %p78 = pneg %p72
      %p79 = scmp.eq.s32.totalorder %s19, 23
      %p80 = por %p78, %p79
      %p81 = scmp.ne.s32.totalorder %s73, %s76
      %p82 = scmp.eq.s32.totalorder %s19, 0
      %p83 = por %p81, %p82
      %p84 = scmp.ne.s32.totalorder %s73, %s76
      %p85 = scmp.eq.s32.totalorder %s24, 23
      %p86 = por %p84, %p85
      %p87 = scmp.ne.s32.totalorder %s76, %s77
      %p88 = scmp.eq.s32.totalorder %s24, 0
      %p89 = por %p87, %p88
      %p90 = scmp.ne.s32.totalorder %s76, %s77
      %p91 = scmp.eq.s32.totalorder %s25, 23
      %p92 = por %p90, %p91
      %p94 = scmp.ne.s32.totalorder %s77, %s93
      %p95 = scmp.eq.s32.totalorder %s25, 0
      %p96 = por %p94, %p95
      %p97 = scmp.le.s32.totalorder 1, %s19
      %p98 = scmp.lt.s32.totalorder %s19, 25
      %p99 = pnand %p97, %p98
      %p100 = pneg %p99
      // Predicated region
      $region9: #{tpu_custom_call.1} parent=5 // pred_check
        _
      $region10: #{tpu_custom_call.1} parent=5 // pred_check_branch
        %102 = sbr.rel (%p99) target = $region12
      $region11: #{tpu_custom_call.1} parent=5 // pred_region
        %s103 = ssub.s32 %s19, 1
      $region12: #{tpu_custom_call.1} parent=5 // pred_fallthru
        _
      %p104 = scmp.lt.s32.totalorder %s19, 24
      // Predicated region
      $region13: #{tpu_custom_call.1} parent=5 // pred_check
        %p105 = pneg %p104
      $region14: #{tpu_custom_call.1} parent=5 // pred_check_branch
        %107 = sbr.rel (%p105) target = $region16
      $region15: #{tpu_custom_call.1} parent=5 // pred_region
        // Predicated region
        $region17: #{tpu_custom_call.1} parent=15 // pred_check
          %p108 = pneg %p55
        $region18: #{tpu_custom_call.1} parent=15 // pred_check_branch
          %110 = sbr.rel (%p108) target = $region20
        $region19: #{tpu_custom_call.1} parent=15 // pred_region
          %s111 = sand.u32 %s45, 1
          %s112 = sand.u32 %s45, 1
          %s113 = smul.addr %s112, 64
          %s114 = scalar_lea.vmem [#allocation4], %s113
          %s115 = sld [smem:[#allocation3 + %s27]]
          %s116 = smul.u32 4, %s26
          %s117 = smul.addr %s115, 2
          %s118 = smul.addr %s116, 16
          %s119 = sadd.s32 %s117, %s118
          %s120 = smul.addr %s119, 8
          %s121 = scalar_lea.vmem %s1, %s120
          // Predicated region
          $region21: #{tpu_custom_call.1} parent=19 // pred_check
            _
          $region22: #{tpu_custom_call.1} parent=19 // pred_check_branch
            %123 = sbr.rel (0) target = $region24
          $region23: #{tpu_custom_call.1} parent=19 // pred_region
            // Predicated region
            $region25: #{tpu_custom_call.1} parent=23 // pred_check
              _
            $region26: #{tpu_custom_call.1} parent=23 // pred_check_branch
              %125 = sbr.rel (0) target = $region28
            $region27: #{tpu_custom_call.1} parent=23 // pred_region
              // Predicated region
              $region40: #{tpu_custom_call.1} parent=27 // pred_check
                _
              $region41: #{tpu_custom_call.1} parent=27 // pred_check_branch
                %155 = sbr.rel (0) target = $region43
              $region42: #{tpu_custom_call.1} parent=27 // pred_region
                loop: start=0, step=1, limit=1
                $region44: #{tpu_custom_call.1} parent=42 // loop_pre_header
                  _
                $region45: #{tpu_custom_call.1} parent=42 // loop_header
                  %s157 = sphi 0, %s161
                  %p158 = scmp.ge.s32.totalorder %s157, 1
                  %s162 = sphi %s121, %s121
                  %s163 = sphi %s114, %s114
                $region46: #{tpu_custom_call.1} parent=42 // loop_header_branch
                  %160 = sbr.rel (%p158) target = $region50
                $region47: #{tpu_custom_call.1} parent=42 // loop_body
                  %v164 = vld [vmem:[%s162] sm:$0xff]
                  %165 = vst [vmem:[%s163] sm:$0xff] %v164
                  %v166 = vld [vmem:[%s162 + $0x8] sm:$0xff]
                  %167 = vst [vmem:[%s163 + $0x8] sm:$0xff] %v166
                  %v168 = vld [vmem:[%s162 + $0x80] sm:$0xff]
                  %169 = vst [vmem:[%s163 + $0x10] sm:$0xff] %v168
                  %v170 = vld [vmem:[%s162 + $0x88] sm:$0xff]
                  %171 = vst [vmem:[%s163 + $0x18] sm:$0xff] %v170
                  %v172 = vld [vmem:[%s162 + $0x100] sm:$0xff]
                  %173 = vst [vmem:[%s163 + $0x20] sm:$0xff] %v172
                  %v174 = vld [vmem:[%s162 + $0x108] sm:$0xff]
                  %175 = vst [vmem:[%s163 + $0x28] sm:$0xff] %v174
                  %v176 = vld [vmem:[%s162 + $0x180] sm:$0xff]
                  %177 = vst [vmem:[%s163 + $0x30] sm:$0xff] %v176
                  %v178 = vld [vmem:[%s162 + $0x188] sm:$0xff]
                  %179 = vst [vmem:[%s163 + $0x38] sm:$0xff] %v178
                $region48: #{tpu_custom_call.1} parent=42 // loop_footer
                  %s161 = sadd.s32 1, %s157
                $region49: #{tpu_custom_call.1} parent=42 // loop_footer_branch
                  %156 = sbr.rel target = $region45
                $region50: #{tpu_custom_call.1} parent=42 // loop_exit
                  _
              $region43: #{tpu_custom_call.1} parent=27 // pred_fallthru
                _
              // Predicated region
              $region51: #{tpu_custom_call.1} parent=27 // pred_check
                _
              $region52: #{tpu_custom_call.1} parent=27 // pred_check_branch
                %181 = sbr.rel target = $region54
              $region53: #{tpu_custom_call.1} parent=27 // pred_region
                _
              $region54: #{tpu_custom_call.1} parent=27 // pred_fallthru
                _
            $region28: #{tpu_custom_call.1} parent=23 // pred_fallthru
              _
            // Predicated region
            $region29: #{tpu_custom_call.1} parent=23 // pred_check
              _
            $region30: #{tpu_custom_call.1} parent=23 // pred_check_branch
              %127 = sbr.rel target = $region32
            $region31: #{tpu_custom_call.1} parent=23 // pred_region
              %s129 = ssub.s32 256, 1
              loop: start=0, step=1, limit=1
              $region33: #{tpu_custom_call.1} parent=31 // loop_pre_header
                _
              $region34: #{tpu_custom_call.1} parent=31 // loop_header
                %s131 = sphi 0, %s135
                %p132 = scmp.ge.s32.totalorder %s131, 1
                %s136 = sphi %s121, %s121
                %s137 = sphi %s114, %s114
              $region35: #{tpu_custom_call.1} parent=31 // loop_header_branch
                %134 = sbr.rel (%p132) target = $region39
              $region36: #{tpu_custom_call.1} parent=31 // loop_body
                %v138 = vld [vmem:[%s136] sm:%s129]
                %139 = vst [vmem:[%s137] sm:%s129] %v138
                %v140 = vld [vmem:[%s136 + $0x8] sm:%s129]
                %141 = vst [vmem:[%s137 + $0x8] sm:%s129] %v140
                %v142 = vld [vmem:[%s136 + $0x80] sm:%s129]
                %143 = vst [vmem:[%s137 + $0x10] sm:%s129] %v142
                %v144 = vld [vmem:[%s136 + $0x88] sm:%s129]
                %145 = vst [vmem:[%s137 + $0x18] sm:%s129] %v144
                %v146 = vld [vmem:[%s136 + $0x100] sm:%s129]
                %147 = vst [vmem:[%s137 + $0x20] sm:%s129] %v146
                %v148 = vld [vmem:[%s136 + $0x108] sm:%s129]
                %149 = vst [vmem:[%s137 + $0x28] sm:%s129] %v148
                %v150 = vld [vmem:[%s136 + $0x180] sm:%s129]
                %151 = vst [vmem:[%s137 + $0x30] sm:%s129] %v150
                %v152 = vld [vmem:[%s136 + $0x188] sm:%s129]
                %153 = vst [vmem:[%s137 + $0x38] sm:%s129] %v152
              $region37: #{tpu_custom_call.1} parent=31 // loop_footer
                %s135 = sadd.s32 1, %s131
              $region38: #{tpu_custom_call.1} parent=31 // loop_footer_branch
                %130 = sbr.rel target = $region34
              $region39: #{tpu_custom_call.1} parent=31 // loop_exit
                _
            $region32: #{tpu_custom_call.1} parent=23 // pred_fallthru
              _
          $region24: #{tpu_custom_call.1} parent=19 // pred_fallthru
            _
          %182 = vnop
        $region20: #{tpu_custom_call.1} parent=15 // pred_fallthru
          _
      $region16: #{tpu_custom_call.1} parent=5 // pred_fallthru
        _
      %p183 = scmp.le.s32.totalorder 1, %s19
      %p184 = scmp.lt.s32.totalorder %s19, 25
      %p185 = pnand %p183, %p184
      %p186 = pneg %p185
      // Predicated region
      $region55: #{tpu_custom_call.1} parent=5 // pred_check
        _
      $region56: #{tpu_custom_call.1} parent=5 // pred_check_branch
        %188 = sbr.rel (%p185) target = $region58
      $region57: #{tpu_custom_call.1} parent=5 // pred_region
        %s189 = ssub.s32 %s19, 1
        %s190 = sand.u32 %s48, 1
        %s191 = sand.u32 %s48, 1
        %s192 = smul.addr %s191, 64
        %s193 = scalar_lea.vmem [#allocation4], %s192
        // Predicated region
        $region59: #{tpu_custom_call.1} parent=57 // pred_check
          %p194 = pneg %p61
        $region60: #{tpu_custom_call.1} parent=57 // pred_check_branch
          %196 = sbr.rel (%p194) target = $region62
        $region61: #{tpu_custom_call.1} parent=57 // pred_region
          _
        $region62: #{tpu_custom_call.1} parent=57 // pred_fallthru
          _
        %s197 = sand.u32 %s48, 1
        %s198 = sand.u32 %s48, 1
        %s199 = smul.addr %s198, 64
        %s200 = scalar_lea.vmem [#allocation4], %s199
        %p201 = pneg %p61
        %p202 = pneg %p58
        %p203 = pneg %p89
        %p204 = pneg %p86
        %s205 = sand.u32 %s76, 1
        %s206 = scalar_lea.sflag [#allocation6], %s205
        %s207 = sand.u32 %s76, 1
        %s208 = smul.addr %s207, 64
        %s209 = scalar_lea.vmem [#allocation5], %s208
        %s210 = sld [smem:[#allocation3 + %s29]]
        %s211 = smul.u32 4, %s28
        %s212 = smul.u32 4, %s28
        %v213 = vld [vmem:[%s193] sm:$0xff]
        %v214 = vld [vmem:[%s193 + $0x8] sm:$0xf]
        %v215 = vld [vmem:[%s193 + $0x10] sm:$0xff]
        %v216 = vld [vmem:[%s193 + $0x18] sm:$0xf]
        %v217 = vld [vmem:[%s193 + $0x20] sm:$0xff]
        %v218 = vld [vmem:[%s193 + $0x28] sm:$0xf]
        %v219 = vld [vmem:[%s193 + $0x30] sm:$0xff]
        %v220 = vld [vmem:[%s193 + $0x38] sm:$0xf]
        %229 = vrot.lane.b32.xlu0 %v213, 126
        %v230 = vpop.permute.xlu0 %229
        %231 = vrot.lane.b32.xlu0 %v214, 126
        %v232 = vpop.permute.xlu0 %231
        %233 = vrot.lane.b32.xlu0 %v215, 126
        %v234 = vpop.permute.xlu0 %233
        %235 = vrot.lane.b32.xlu0 %v216, 126
        %v236 = vpop.permute.xlu0 %235
        %237 = vrot.lane.b32.xlu0 %v217, 126
        %v238 = vpop.permute.xlu0 %237
        %239 = vrot.lane.b32.xlu0 %v218, 126
        %v240 = vpop.permute.xlu0 %239
        %241 = vrot.lane.b32.xlu0 %v219, 126
        %v242 = vpop.permute.xlu0 %241
        %243 = vrot.lane.b32.xlu0 %v220, 126
        %v244 = vpop.permute.xlu0 %243
        %vm253 = vcmask 7168
        %v254 = vsel %vm253, %v230, %v213
        %v255 = vsel %vm253, %v232, %v214
        %v256 = vsel %vm253, %v234, %v215
        %v257 = vsel %vm253, %v236, %v216
        %v258 = vsel %vm253, %v238, %v217
        %v259 = vsel %vm253, %v240, %v218
        %v260 = vsel %vm253, %v242, %v219
        %v261 = vsel %vm253, %v244, %v220
        %262 = vrot.lane.b32.xlu0 %v213, 114
        %v263 = vpop.permute.xlu0 %262
        %264 = vrot.lane.b32.xlu0 %v214, 114
        %v265 = vpop.permute.xlu0 %264
        %266 = vrot.lane.b32.xlu0 %v215, 114
        %v267 = vpop.permute.xlu0 %266
        %268 = vrot.lane.b32.xlu0 %v216, 114
        %v269 = vpop.permute.xlu0 %268
        %270 = vrot.lane.b32.xlu0 %v217, 114
        %v271 = vpop.permute.xlu0 %270
        %272 = vrot.lane.b32.xlu0 %v218, 114
        %v273 = vpop.permute.xlu0 %272
        %274 = vrot.lane.b32.xlu0 %v219, 114
        %v275 = vpop.permute.xlu0 %274
        %276 = vrot.lane.b32.xlu0 %v220, 114
        %v277 = vpop.permute.xlu0 %276
        %286 = vrot.lane.b32.xlu0 %v213, 116
        %v287 = vpop.permute.xlu0 %286
        %288 = vrot.lane.b32.xlu0 %v214, 116
        %v289 = vpop.permute.xlu0 %288
        %290 = vrot.lane.b32.xlu0 %v215, 116
        %v291 = vpop.permute.xlu0 %290
        %292 = vrot.lane.b32.xlu0 %v216, 116
        %v293 = vpop.permute.xlu0 %292
        %294 = vrot.lane.b32.xlu0 %v217, 116
        %v295 = vpop.permute.xlu0 %294
        %296 = vrot.lane.b32.xlu0 %v218, 116
        %v297 = vpop.permute.xlu0 %296
        %298 = vrot.lane.b32.xlu0 %v219, 116
        %v299 = vpop.permute.xlu0 %298
        %300 = vrot.lane.b32.xlu0 %v220, 116
        %v301 = vpop.permute.xlu0 %300
        %v310 = vsel %vm253, %v263, %v287
        %v311 = vsel %vm253, %v265, %v289
        %v312 = vsel %vm253, %v267, %v291
        %v313 = vsel %vm253, %v269, %v293
        %v314 = vsel %vm253, %v271, %v295
        %v315 = vsel %vm253, %v273, %v297
        %v316 = vsel %vm253, %v275, %v299
        %v317 = vsel %vm253, %v277, %v301
        %318 = vrot.lane.b32.xlu0 %v213, 2
        %v319 = vpop.permute.xlu0 %318
        %320 = vrot.lane.b32.xlu0 %v214, 2
        %v321 = vpop.permute.xlu0 %320
        %322 = vrot.lane.b32.xlu0 %v215, 2
        %v323 = vpop.permute.xlu0 %322
        %324 = vrot.lane.b32.xlu0 %v216, 2
        %v325 = vpop.permute.xlu0 %324
        %326 = vrot.lane.b32.xlu0 %v217, 2
        %v327 = vpop.permute.xlu0 %326
        %328 = vrot.lane.b32.xlu0 %v218, 2
        %v329 = vpop.permute.xlu0 %328
        %330 = vrot.lane.b32.xlu0 %v219, 2
        %v331 = vpop.permute.xlu0 %330
        %332 = vrot.lane.b32.xlu0 %v220, 2
        %v333 = vpop.permute.xlu0 %332
        %350 = vrot.lane.b32.xlu0 %v310, 18
        %v351 = vpop.permute.xlu0 %350
        %352 = vrot.lane.b32.xlu0 %v311, 18
        %v353 = vpop.permute.xlu0 %352
        %354 = vrot.lane.b32.xlu0 %v312, 18
        %v355 = vpop.permute.xlu0 %354
        %356 = vrot.lane.b32.xlu0 %v313, 18
        %v357 = vpop.permute.xlu0 %356
        %358 = vrot.lane.b32.xlu0 %v314, 18
        %v359 = vpop.permute.xlu0 %358
        %360 = vrot.lane.b32.xlu0 %v315, 18
        %v361 = vpop.permute.xlu0 %360
        %362 = vrot.lane.b32.xlu0 %v316, 18
        %v363 = vpop.permute.xlu0 %362
        %364 = vrot.lane.b32.xlu0 %v317, 18
        %v365 = vpop.permute.xlu0 %364
        %vm374 = vcmask 15360
        %v375 = vsel %vm374, %v254, %v319
        %v376 = vsel %vm374, %v255, %v321
        %v377 = vsel %vm374, %v256, %v323
        %v378 = vsel %vm374, %v257, %v325
        %v379 = vsel %vm374, %v258, %v327
        %v380 = vsel %vm374, %v259, %v329
        %v381 = vsel %vm374, %v260, %v331
        %v382 = vsel %vm374, %v261, %v333
        %vm383 = vcmask 146432
        %v384 = vsel %vm383, %v375, %v351
        %v385 = vsel %vm383, %v376, %v353
        %v386 = vsel %vm383, %v377, %v355
        %v387 = vsel %vm383, %v378, %v357
        %v388 = vsel %vm383, %v379, %v359
        %v389 = vsel %vm383, %v380, %v361
        %v390 = vsel %vm383, %v381, %v363
        %v391 = vsel %vm383, %v382, %v365
        %v396 = vrot.slane %v384, 2
        %v397 = vrot.slane %v386, 2
        %v398 = vrot.slane %v388, 2
        %v399 = vrot.slane %v390, 2
        %vm404 = vcmask 1040384
        %v405 = vsel %vm404, %v396, %v384
        %v406 = vsel %vm404, %v397, %v386
        %v407 = vsel %vm404, %v398, %v388
        %v408 = vsel %vm404, %v399, %v390
        %v413 = vrot.slane %v385, 2
        %v414 = vrot.slane %v387, 2
        %v415 = vrot.slane %v389, 2
        %v416 = vrot.slane %v391, 2
        %v421 = vsel %vm404, %v413, %v385
        %v422 = vsel %vm404, %v414, %v387
        %v423 = vsel %vm404, %v415, %v389
        %v424 = vsel %vm404, %v416, %v391
        %vm425 = vcmask 1041408
        %v426 = vrot.slane %v384, 6
        %v427 = vrot.slane %v385, 6
        %v428 = vsel %vm425, %v426, %v427
        %v429 = vrot.slane %v386, 6
        %v430 = vrot.slane %v387, 6
        %v431 = vsel %vm425, %v429, %v430
        %v432 = vrot.slane %v388, 6
        %v433 = vrot.slane %v389, 6
        %v434 = vsel %vm425, %v432, %v433
        %v435 = vrot.slane %v390, 6
        %v436 = vrot.slane %v391, 6
        %v437 = vsel %vm425, %v435, %v436
        %v450 = vrot.slane %v421, 2
        %v451 = vrot.slane %v422, 2
        %v452 = vrot.slane %v423, 2
        %v453 = vrot.slane %v424, 2
        %v458 = vsel %vm425, %v405, %v426
        %v459 = vsel %vm425, %v406, %v429
        %v460 = vsel %vm425, %v407, %v432
        %v461 = vsel %vm425, %v408, %v435
        %vm462 = vcmask 1045504
        %v463 = vsel %vm462, %v428, %v450
        %v464 = vsel %vm462, %v431, %v451
        %v465 = vsel %vm462, %v434, %v452
        %v466 = vsel %vm462, %v437, %v453
        %vm467 = vcmask 162816
        %468 = vst.msk [vmem:[%s209] sm:$0xff] %vm467, %v458
        %469 = vst.msk [vmem:[%s209 + $0x8] sm:$0xff] %vm467, %v463
        %470 = vst.msk [vmem:[%s209 + $0x10] sm:$0xff] %vm467, %v459
        %471 = vst.msk [vmem:[%s209 + $0x18] sm:$0xff] %vm467, %v464
        %472 = vst.msk [vmem:[%s209 + $0x20] sm:$0xff] %vm467, %v460
        %473 = vst.msk [vmem:[%s209 + $0x28] sm:$0xff] %vm467, %v465
        %474 = vst.msk [vmem:[%s209 + $0x30] sm:$0xff] %vm467, %v461
        %475 = vst.msk [vmem:[%s209 + $0x38] sm:$0xff] %vm467, %v466
        %s476 = sand.u32 %s76, 1
        %s477 = scalar_lea.sflag [#allocation6], %s476
        %s478 = sand.u32 %s76, 1
        %s479 = smul.addr %s478, 64
        %s480 = scalar_lea.vmem [#allocation5], %s479
        // Predicated region
        $region63: #{tpu_custom_call.1} parent=57 // pred_check
          %p481 = pneg %p86
        $region64: #{tpu_custom_call.1} parent=57 // pred_check_branch
          %483 = sbr.rel (%p481) target = $region66
        $region65: #{tpu_custom_call.1} parent=57 // pred_region
          #allocation8 [shape = 'u32[6]{0}', space=smem, size = 0x18, scoped, tag = 'DMA stride descriptor']
          %s484 = smul.u32 4, %s28
          %486 = vsyncadd %s477, 0
          %s487 = smul.addr %s29, 2
          %s488 = smul.addr %s484, 24
          %s489 = sadd.s32 %s487, %s488
          %s490 = smul.addr %s489, 8
          %s491 = scalar_lea.hbm %s2, %s490
          %s493 = sshll.u32 1, 14
          %s494 = sxor.u32 4294967295, %s493
          %s497 = sshll.u32 7, 18
          %s498 = sxor.u32 4294967295, %s497
          %s499 = sand.u32 0, %s498
          %s501 = sor.u32 %s499, 0
          %s502 = sshll.u32 %s480, 4
          %s503 = int_to_ptr.vmem [resolvable:$true] %s502
          %s504 = sshll.u32 %s491, 4
          %s505 = int_to_ptr.hbm [resolvable:$true] %s504
          %511 = sst [smem:[#allocation8]] 256
          %s512 = scalar_lea.smem [#allocation8], 1
          %513 = sst [smem:[%s512]] 3072
          %s514 = scalar_lea.smem [#allocation8], 2
          %515 = sst [smem:[%s514]] 2
          %s516 = scalar_lea.smem [#allocation8], 3
          %517 = sst [smem:[%s516]] 128
          %s518 = scalar_lea.smem [#allocation8], 4
          %519 = sst [smem:[%s518]] 128
          %s520 = scalar_lea.smem [#allocation8], 5
          %521 = sst [smem:[%s520]] 8
          %523 = dma.general %s503, 1024, %s505, %s477, [#allocation7], [#allocation8], %s501, 0
        $region66: #{tpu_custom_call.1} parent=57 // pred_fallthru
          _
      $region58: #{tpu_custom_call.1} parent=5 // pred_fallthru
        _
      %p524 = scmp.le.s32.totalorder 2, %s19
      // Predicated region
      $region67: #{tpu_custom_call.1} parent=5 // pred_check
        %p525 = pneg %p524
      $region68: #{tpu_custom_call.1} parent=5 // pred_check_branch
        %527 = sbr.rel (%p525) target = $region70
      $region69: #{tpu_custom_call.1} parent=5 // pred_region
        %s528 = ssub.s32 %s19, 2
        // Predicated region
        $region71: #{tpu_custom_call.1} parent=69 // pred_check
          %p529 = pneg %p92
        $region72: #{tpu_custom_call.1} parent=69 // pred_check_branch
          %531 = sbr.rel (%p529) target = $region74
        $region73: #{tpu_custom_call.1} parent=69 // pred_region
          %s532 = sand.u32 %s77, 1
          %s533 = scalar_lea.sflag [#allocation6], %s532
          %s534 = sand.u32 %s77, 1
          %s535 = smul.addr %s534, 64
          %s536 = scalar_lea.vmem [#allocation5], %s535
          %538 = dma.done %s533, 1024
        $region74: #{tpu_custom_call.1} parent=69 // pred_fallthru
          _
      $region70: #{tpu_custom_call.1} parent=5 // pred_fallthru
        _
    $region6: #{tpu_custom_call.1} parent=1 // loop_footer
      %s23 = sadd.s32 1, %s19
    $region7: #{tpu_custom_call.1} parent=1 // loop_footer_branch
      %18 = sbr.rel target = $region3
    $region8: #{tpu_custom_call.1} parent=1 // loop_exit
      _
    %539 = vsyncpa [#allocation6], 1
    %s540 = scalar_lea.sflag [#allocation6], 1
    %541 = vsyncpa %s540, 1

</llo_original>
